<compile_context>
chip_gen: v5e
topology: v5e:2x2
jax: 0.10.0
libtpu: 0.0.40
codegen_flags: <defaults>
</compile_context>

<pallas_src>
import math

import jax
import jax.numpy as jnp
from jax.experimental import pallas as pl
from jax.experimental.pallas import tpu as pltpu

_LANE = 128
_SMOOTH = 1.0


def _partial_sums_kernel(pred_ref, gt_ref, inter_ref, union_ref):
    """Per-row partial sums of (p*g) and (p*p + g*g).

    Grid: (row_blocks [parallel], lane_chunks [arbitrary]).  The (TR, 128)
    output blocks keep the same block index across the lane axis, so they stay
    resident in VMEM and act as accumulators.  All per-tile reduction work is
    plain VPU adds over 128-lane groups; the cross-lane fold happens in JAX.
    """
    k = pl.program_id(1)

    @pl.when(k == 0)
    def _():
        inter_ref[...] = jnp.zeros_like(inter_ref)
        union_ref[...] = jnp.zeros_like(union_ref)

    tn = pred_ref.shape[1]
    acc_i = jnp.zeros(inter_ref.shape, jnp.float32)
    acc_u = jnp.zeros(union_ref.shape, jnp.float32)
    for j in range(tn // _LANE):  # static unroll, capped at 64 groups by _plan
        p = pred_ref[:, j * _LANE:(j + 1) * _LANE].astype(jnp.float32)
        g = gt_ref[:, j * _LANE:(j + 1) * _LANE].astype(jnp.float32)
        acc_i = acc_i + p * g
        acc_u = acc_u + (p * p + g * g)  # fused union accumulation
    inter_ref[...] += acc_i
    union_ref[...] += acc_u


def _plan(batch, n_feat, itemsize):
    """Choose (rows-per-sample S, lane width Nr, total rows R, TR, TN)."""
    target_lanes = 2048  # per-row lane extent target
    min_rows = 8         # fill all 8 sublanes even at tiny batch

    s = max(1, -(-n_feat // target_lanes))          # ceil(N / target_lanes)
    if batch * s < min_rows:
        s = -(-min_rows // batch)                   # ceil(8 / B)
    # make total rows a multiple of 8 (dense vregs, unmasked (8,128) tiles)
    step = 8 // math.gcd(batch, 8)
    s = -(-s // step) * step

    per_row = -(-n_feat // s)                       # ceil(N / S)
    nr = -(-per_row // _LANE) * _LANE               # round up to 128 lanes
    rows = batch * s

    # row tile: largest multiple of 8 dividing R, capped at 256
    tr = min(rows, 256)
    tr -= tr % 8
    while rows % tr:
        tr -= 8

    # lane tile: largest multiple-of-128 divisor of Nr that fits the VMEM
    # budget (2 inputs x 2 pipeline buffers) and keeps the static unroll small.
    budget = 12 * 1024 * 1024
    max_groups = 64
    groups = nr // _LANE
    tn = _LANE
    for d in range(1, groups + 1):
        if groups % d or d > max_groups:
            continue
        cand = d * _LANE
        if 4 * tr * cand * itemsize <= budget:
            tn = cand
    return s, nr, rows, tr, tn


def log_cosh_dice_loss(pred, gt):
    """Log-cosh dice loss matching the PyTorch reference.

    Accepts f32 or bf16 inputs of shape (B, ...); streams at native dtype and
    accumulates in f32 inside the kernel.
    """
    assert pred.shape == gt.shape
    batch = pred.shape[0]
    n_feat = 1
    for d in pred.shape[1:]:
        n_feat *= int(d)

    itemsize = jnp.dtype(pred.dtype).itemsize
    s, nr, rows, tr, tn = _plan(batch, n_feat, itemsize)

    p2 = pred.reshape(batch, n_feat)
    g2 = gt.reshape(batch, n_feat)
    padded = s * nr
    if padded != n_feat:
        # zero padding contributes nothing to inter or union
        pad = padded - n_feat
        p2 = jnp.pad(p2, ((0, 0), (0, pad)))
        g2 = jnp.pad(g2, ((0, 0), (0, pad)))
    p3 = p2.reshape(rows, nr)
    g3 = g2.reshape(rows, nr)

    grid = (rows // tr, nr // tn)
    inter_part, union_part = pl.pallas_call(
        _partial_sums_kernel,
        out_shape=(jax.ShapeDtypeStruct((rows, _LANE), jnp.float32),
                   jax.ShapeDtypeStruct((rows, _LANE), jnp.float32)),
        grid_spec=pltpu.PrefetchScalarGridSpec(
            num_scalar_prefetch=0,
            grid=grid,
            in_specs=[
                pl.BlockSpec((tr, tn), lambda i, k: (i, k)),
                pl.BlockSpec((tr, tn), lambda i, k: (i, k)),
            ],
            out_specs=[
                pl.BlockSpec((tr, _LANE), lambda i, k: (i, 0)),
                pl.BlockSpec((tr, _LANE), lambda i, k: (i, 0)),
            ],
        ),
        compiler_params=pltpu.CompilerParams(
            dimension_semantics=("parallel", "arbitrary"),
            vmem_limit_bytes=32 * 1024 * 1024,
        ),
    )(p3, g3)

    # Tiny finalize on (R, 128) lane-dense partials.
    inter = inter_part.sum(axis=1).reshape(batch, s).sum(axis=1)
    union = union_part.sum(axis=1).reshape(batch, s).sum(axis=1)
    dice = 1.0 - (2.0 * inter + _SMOOTH) / (union + _SMOOTH)
    x = jnp.mean(dice)
    return jnp.log((jnp.exp(x) + jnp.exp(-x)) / 2.0)


if __name__ == "__main__":
    key = jax.random.PRNGKey(0)
    kp, kg = jax.random.split(key)
    B, C, H, W = 2, 4, 16, 16
    # pred: soft predictions in [0, 1]; gt: binary masks
    pred = jax.nn.sigmoid(jax.random.normal(kp, (B, C, H, W), dtype=jnp.float32))
    gt = (jax.random.uniform(kg, (B, C, H, W)) > 0.5).astype(jnp.float32)

    loss = log_cosh_dice_loss(pred, gt)
    jax.block_until_ready(loss)

    # Pure-JAX reference of the same math.
    axes = tuple(range(1, pred.ndim))
    inter = jnp.sum(pred * gt, axis=axes)
    union = jnp.sum(pred ** 2, axis=axes) + jnp.sum(gt ** 2, axis=axes)
    x = jnp.mean(1.0 - (2.0 * inter + 1.0) / (union + 1.0))
    ref = jnp.log((jnp.exp(x) + jnp.exp(-x)) / 2.0)
    assert jnp.allclose(loss, ref, rtol=1e-5, atol=1e-5), (loss, ref)

    print("KERNEL_OK")
</pallas_src>

<mosaic_0001>
module attributes {stable_mosaic.version = 11 : i64} {
  func.func @_partial_sums_kernel(%arg0: i32, %arg1: i32, %arg2: memref<8x256xf32, #tpu.memory_space<vmem>>, %arg3: memref<8x256xf32, #tpu.memory_space<vmem>>, %arg4: memref<8x128xf32, #tpu.memory_space<vmem>>, %arg5: memref<8x128xf32, #tpu.memory_space<vmem>>) attributes {dimension_semantics = [#tpu.dimension_semantics<parallel>, #tpu.dimension_semantics<arbitrary>], iteration_bounds = array<i64: 1, 1>, scalar_prefetch = 0 : i64, scratch_operands = 0 : i64, tpu.core_type = #tpu.core_type<tc>, window_params = [{transform_indices = @transform_0, window_bounds = array<i64: 8, 256>}, {transform_indices = @transform_1, window_bounds = array<i64: 8, 256>}, {transform_indices = @transform_2, window_bounds = array<i64: 8, 128>}, {transform_indices = @transform_3, window_bounds = array<i64: 8, 128>}]} {
    %c0_i32 = arith.constant 0 : i32
    %0 = arith.cmpi eq, %arg1, %c0_i32 : i32
    %1 = arith.extui %0 : i1 to i32
    %c0_i32_0 = arith.constant 0 : i32
    %2 = arith.cmpi ne, %1, %c0_i32_0 : i32
    scf.if %2 {
      %cst_16 = arith.constant 0.000000e+00 : f32
      %27 = vector.broadcast %cst_16 : f32 to vector<8x128xf32>
      %c0_17 = arith.constant 0 : index
      %c0_18 = arith.constant 0 : index
      %28 = vector.load %arg4[%c0_17, %c0_18] : memref<8x128xf32, #tpu.memory_space<vmem>>, vector<8x128xf32>
      tpu.vector_store %arg4[%c0_17, %c0_18], %27 {strides = array<i32>} : memref<8x128xf32, #tpu.memory_space<vmem>>, vector<8x128xf32>,
      %cst_19 = arith.constant 0.000000e+00 : f32
      %29 = vector.broadcast %cst_19 : f32 to vector<8x128xf32>
      %c0_20 = arith.constant 0 : index
      %c0_21 = arith.constant 0 : index
      %30 = vector.load %arg5[%c0_20, %c0_21] : memref<8x128xf32, #tpu.memory_space<vmem>>, vector<8x128xf32>
      tpu.vector_store %arg5[%c0_20, %c0_21], %29 {strides = array<i32>} : memref<8x128xf32, #tpu.memory_space<vmem>>, vector<8x128xf32>,
    } else {
    }
    %cst = arith.constant 0.000000e+00 : f32
    %3 = vector.broadcast %cst : f32 to vector<8x128xf32>
    %cst_1 = arith.constant 0.000000e+00 : f32
    %4 = vector.broadcast %cst_1 : f32 to vector<8x128xf32>
    %c0 = arith.constant 0 : index
    %c0_2 = arith.constant 0 : index
    %5 = vector.load %arg2[%c0, %c0_2] : memref<8x256xf32, #tpu.memory_space<vmem>>, vector<8x128xf32>
    %c0_3 = arith.constant 0 : index
    %c0_4 = arith.constant 0 : index
    %6 = vector.load %arg3[%c0_3, %c0_4] : memref<8x256xf32, #tpu.memory_space<vmem>>, vector<8x128xf32>
    %7 = arith.mulf %5, %6 : vector<8x128xf32>
    %8 = arith.addf %3, %7 : vector<8x128xf32>
    %9 = arith.mulf %5, %5 : vector<8x128xf32>
    %10 = arith.mulf %6, %6 : vector<8x128xf32>
    %11 = arith.addf %9, %10 : vector<8x128xf32>
    %12 = arith.addf %4, %11 : vector<8x128xf32>
    %c0_5 = arith.constant 0 : index
    %c128 = arith.constant 128 : index
    %13 = vector.load %arg2[%c0_5, %c128] : memref<8x256xf32, #tpu.memory_space<vmem>>, vector<8x128xf32>
    %c0_6 = arith.constant 0 : index
    %c128_7 = arith.constant 128 : index
    %14 = vector.load %arg3[%c0_6, %c128_7] : memref<8x256xf32, #tpu.memory_space<vmem>>, vector<8x128xf32>
    %15 = arith.mulf %13, %14 : vector<8x128xf32>
    %16 = arith.addf %8, %15 : vector<8x128xf32>
    %17 = arith.mulf %13, %13 : vector<8x128xf32>
    %18 = arith.mulf %14, %14 : vector<8x128xf32>
    %19 = arith.addf %17, %18 : vector<8x128xf32>
    %20 = arith.addf %12, %19 : vector<8x128xf32>
    %c0_8 = arith.constant 0 : index
    %c0_9 = arith.constant 0 : index
    %21 = vector.load %arg4[%c0_8, %c0_9] : memref<8x128xf32, #tpu.memory_space<vmem>>, vector<8x128xf32>
    %22 = arith.addf %21, %16 : vector<8x128xf32>
    %c0_10 = arith.constant 0 : index
    %c0_11 = arith.constant 0 : index
    %23 = vector.load %arg4[%c0_10, %c0_11] : memref<8x128xf32, #tpu.memory_space<vmem>>, vector<8x128xf32>
    tpu.vector_store %arg4[%c0_10, %c0_11], %22 {strides = array<i32>} : memref<8x128xf32, #tpu.memory_space<vmem>>, vector<8x128xf32>,
    %c0_12 = arith.constant 0 : index
    %c0_13 = arith.constant 0 : index
    %24 = vector.load %arg5[%c0_12, %c0_13] : memref<8x128xf32, #tpu.memory_space<vmem>>, vector<8x128xf32>
    %25 = arith.addf %24, %20 : vector<8x128xf32>
    %c0_14 = arith.constant 0 : index
    %c0_15 = arith.constant 0 : index
    %26 = vector.load %arg5[%c0_14, %c0_15] : memref<8x128xf32, #tpu.memory_space<vmem>>, vector<8x128xf32>
    tpu.vector_store %arg5[%c0_14, %c0_15], %25 {strides = array<i32>} : memref<8x128xf32, #tpu.memory_space<vmem>>, vector<8x128xf32>,
    return
  }
  func.func @transform_0(%arg0: i32, %arg1: i32) -> (i32, i32) {
    %c0_i32 = arith.constant 0 : i32
    return %arg0, %arg1 : i32, i32
  }
  func.func @transform_1(%arg0: i32, %arg1: i32) -> (i32, i32) {
    %c0_i32 = arith.constant 0 : i32
    return %arg0, %arg1 : i32, i32
  }
  func.func @transform_2(%arg0: i32, %arg1: i32) -> (i32, i32) {
    %c0_i32 = arith.constant 0 : i32
    %c0_i32_0 = arith.constant 0 : i32
    return %arg0, %c0_i32 : i32, i32
  }
  func.func @transform_3(%arg0: i32, %arg1: i32) -> (i32, i32) {
    %c0_i32 = arith.constant 0 : i32
    %c0_i32_0 = arith.constant 0 : i32
    return %arg0, %c0_i32 : i32, i32
  }
}

</mosaic_0001>

<llo_original>
// kernel: tpu_custom_call.1
$region0: #{tpu_custom_call.1}
  #allocation0 [shape = 'u32[]', space=smem, size = 0x4, offset = 0x4, fixed_abs, tag = 'smem constant byte address 0x4 - core index']
  #allocation1 [shape = 'u32[72,128]{1,0:T(1,128)}', space=vmem, size = 0x9000, scoped, tag = 'internal scratch']
  %s0 = inlined_call_operand.hbm [shape: f32[8,256], index: 0, kind: input, shape index: {}]
  %s1 = inlined_call_operand.hbm [shape: f32[8,256], index: 1, kind: input, shape index: {}]
  %s2 = inlined_call_operand.hbm [shape: f32[8,128], index: 2, kind: output, shape index: {0}]
  %s3 = inlined_call_operand.hbm [shape: f32[8,128], index: 3, kind: output, shape index: {1}]
  %4 = xla_tuple %s2, %s3
  %s5 = sld [smem:[#allocation0]]
  $region38: #{tpu_custom_call.1} parent=0
    _
  %s7 = ssub.s32 1, %s5
  %s8 = scalar_select 0, %s7, %s5
  $region1: #{tpu_custom_call.1} parent=0
    #allocation2 [shape = 'u8[8192]{0}', space=vmem, size = 0x2000, scoped, tag = 'input window, operand 0, single buffered']
    #allocation3 [shape = 's32[1]{0}', space=sflag, size = 0x4, scoped, tag = 'scoped memory for tpu_custom_call.1']
    #allocation4 [shape = 's32[1]{0}', space=sflag, size = 0x4, scoped, tag = 'scoped memory for tpu_custom_call.1']
    #allocation5 [shape = 'u8[8192]{0}', space=vmem, size = 0x2000, scoped, tag = 'input window, operand 1, single buffered']
    #allocation6 [shape = 's32[1]{0}', space=sflag, size = 0x4, scoped, tag = 'scoped memory for tpu_custom_call.1']
    #allocation7 [shape = 'u8[4096]{0}', space=vmem, size = 0x1000, scoped, tag = 'output window, operand 0, single buffered']
    #allocation8 [shape = 'u8[4096]{0}', space=vmem, size = 0x1000, scoped, tag = 'output window, operand 1, single buffered']
    #allocation9 [shape = 's32[1]{0}', space=sflag, size = 0x4, scoped, tag = 'scoped memory for tpu_custom_call.1']
    %9 = vsyncpa [#allocation3], 0
    %10 = vsyncpa [#allocation6], 0
    %11 = vsyncpa [#allocation4], 0
    %12 = vsyncpa [#allocation9], 0
    // Predicated region
    $region2: #{tpu_custom_call.1} parent=1 // pred_check
      _
    $region3: #{tpu_custom_call.1} parent=1 // pred_check_branch
      %14 = sbr.rel (0) target = $region5
    $region4: #{tpu_custom_call.1} parent=1 // pred_region
      %16 = vsyncadd [#allocation3], 0
      %s18 = sshll.u32 %s0, 4
      %s19 = int_to_ptr.hbm [resolvable:$true] %s18
      %s20 = sshll.u32 [#allocation2], 4
      %s21 = int_to_ptr.vmem [resolvable:$true] %s20
      %23 = dma.hbm_to_vmem [thread:$0]  %s19, 256, %s21, [#allocation3]
    $region5: #{tpu_custom_call.1} parent=1 // pred_fallthru
      _
    // Predicated region
    $region6: #{tpu_custom_call.1} parent=1 // pred_check
      _
    $region7: #{tpu_custom_call.1} parent=1 // pred_check_branch
      %25 = sbr.rel (0) target = $region9
    $region8: #{tpu_custom_call.1} parent=1 // pred_region
      %27 = vsyncadd [#allocation6], 0
      %s29 = sshll.u32 %s1, 4
      %s30 = int_to_ptr.hbm [resolvable:$true] %s29
      %s31 = sshll.u32 [#allocation5], 4
      %s32 = int_to_ptr.vmem [resolvable:$true] %s31
      %34 = dma.hbm_to_vmem [thread:$0]  %s30, 256, %s32, [#allocation6]
    $region9: #{tpu_custom_call.1} parent=1 // pred_fallthru
      _
    // Predicated region
    $region10: #{tpu_custom_call.1} parent=1 // pred_check
      _
    $region11: #{tpu_custom_call.1} parent=1 // pred_check_branch
      %36 = sbr.rel (0) target = $region13
    $region12: #{tpu_custom_call.1} parent=1 // pred_region
      %38 = dma.done [#allocation3], 256
    $region13: #{tpu_custom_call.1} parent=1 // pred_fallthru
      _
    // Predicated region
    $region14: #{tpu_custom_call.1} parent=1 // pred_check
      _
    $region15: #{tpu_custom_call.1} parent=1 // pred_check_branch
      %40 = sbr.rel (0) target = $region17
    $region16: #{tpu_custom_call.1} parent=1 // pred_region
      %42 = dma.done [#allocation6], 256
    $region17: #{tpu_custom_call.1} parent=1 // pred_fallthru
      _
    %p43 = scmp.eq.s32.totalorder 0, 0
    // Predicated region
    $region18: #{tpu_custom_call.1} parent=1 // pred_check
      %p44 = pneg %p43
    $region19: #{tpu_custom_call.1} parent=1 // pred_check_branch
      %46 = sbr.rel (%p44) target = $region21
    $region20: #{tpu_custom_call.1} parent=1 // pred_region
      %47 = vst [vmem:[#allocation7] sm:$0xff] 0.0
      %48 = vst [vmem:[#allocation8] sm:$0xff] 0.0
    $region21: #{tpu_custom_call.1} parent=1 // pred_fallthru
      _
    %v49 = vld [vmem:[#allocation2] sm:$0xff]
    %v50 = vld [vmem:[#allocation5] sm:$0xff]
    %v51 = vmul.f32 %v49, %v50
    %v52 = vadd.f32 %v51, 0.0
    %v53 = vmul.f32 %v49, %v49
    %v54 = vmul.f32 %v50, %v50
    %v55 = vadd.f32 %v53, %v54
    %v56 = vadd.f32 %v55, 0.0
    %v57 = vld [vmem:[#allocation2 + $0x8] sm:$0xff]
    %v58 = vld [vmem:[#allocation5 + $0x8] sm:$0xff]
    %v59 = vmul.f32 %v57, %v58
    %v60 = vadd.f32 %v52, %v59
    %v61 = vmul.f32 %v57, %v57
    %v62 = vmul.f32 %v58, %v58
    %v63 = vadd.f32 %v61, %v62
    %v64 = vadd.f32 %v56, %v63
    %v65 = vld [vmem:[#allocation7] sm:$0xff]
    %v66 = vadd.f32 %v65, %v60
    %67 = vst [vmem:[#allocation7] sm:$0xff] %v66
    %v68 = vld [vmem:[#allocation8] sm:$0xff]
    %v69 = vadd.f32 %v68, %v64
    %70 = vst [vmem:[#allocation8] sm:$0xff] %v69
    // Predicated region
    $region22: #{tpu_custom_call.1} parent=1 // pred_check
      _
    $region23: #{tpu_custom_call.1} parent=1 // pred_check_branch
      %72 = sbr.rel (0) target = $region25
    $region24: #{tpu_custom_call.1} parent=1 // pred_region
      %74 = vsyncadd [#allocation4], 0
      %s76 = sshll.u32 [#allocation7], 4
      %s77 = int_to_ptr.vmem [resolvable:$true] %s76
      %s78 = sshll.u32 %s2, 4
      %s79 = int_to_ptr.hbm [resolvable:$true] %s78
      %81 = dma.vmem_to_hbm [thread:$0]  %s77, 128, %s79, [#allocation4]
    $region25: #{tpu_custom_call.1} parent=1 // pred_fallthru
      _
    // Predicated region
    $region26: #{tpu_custom_call.1} parent=1 // pred_check
      _
    $region27: #{tpu_custom_call.1} parent=1 // pred_check_branch
      %83 = sbr.rel (0) target = $region29
    $region28: #{tpu_custom_call.1} parent=1 // pred_region
      %85 = vsyncadd [#allocation9], 0
      %s87 = sshll.u32 [#allocation8], 4
      %s88 = int_to_ptr.vmem [resolvable:$true] %s87
      %s89 = sshll.u32 %s3, 4
      %s90 = int_to_ptr.hbm [resolvable:$true] %s89
      %92 = dma.vmem_to_hbm [thread:$0]  %s88, 128, %s90, [#allocation9]
    $region29: #{tpu_custom_call.1} parent=1 // pred_fallthru
      _
    // Predicated region
    $region30: #{tpu_custom_call.1} parent=1 // pred_check
      _
    $region31: #{tpu_custom_call.1} parent=1 // pred_check_branch
      %94 = sbr.rel (0) target = $region33
    $region32: #{tpu_custom_call.1} parent=1 // pred_region
      %96 = dma.done [#allocation4], 128
    $region33: #{tpu_custom_call.1} parent=1 // pred_fallthru
      _
    // Predicated region
    $region34: #{tpu_custom_call.1} parent=1 // pred_check
      _
    $region35: #{tpu_custom_call.1} parent=1 // pred_check_branch
      %98 = sbr.rel (0) target = $region37
    $region36: #{tpu_custom_call.1} parent=1 // pred_region
      %100 = dma.done [#allocation9], 128
    $region37: #{tpu_custom_call.1} parent=1 // pred_fallthru
      _
    %101 = vsyncpa [#allocation3], 1
    %102 = vsyncpa [#allocation6], 1
    %103 = vsyncpa [#allocation4], 1
    %104 = vsyncpa [#allocation9], 1

</llo_original>
